<compile_context>
chip_gen: v7x
topology: tpu7x:2x2x1
jax: 0.10.0
libtpu: 0.0.40
codegen_flags: <defaults>
</compile_context>

<pallas_src>
import jax
import jax.numpy as jnp
from jax.experimental import pallas as pl
from jax.experimental.pallas import tpu as pltpu

P1 = 1                      # exponent from m2.__init__(p1=1)
DROP_P = 0.5                # F.dropout default probability
_INV_2_24 = 1.0 / float(1 << 24)


# ---------------------------------------------------------------------------
# m1: the only live computation -- one uniform [0,1) value of shape (1,)
# ---------------------------------------------------------------------------
def _rand_like_kernel(bits_ref, out_ref):
    """bits_ref: VMEM (1,1) int32 in [0, 2^24); out_ref: VMEM (1,1) f32."""
    out_ref[...] = bits_ref[...].astype(jnp.float32) * jnp.float32(_INV_2_24)


def m1_forward(x1, key):
    """m1.forward(x1): m2(x1) is dead; return rand_like(randint(0,9,(1,)))."""
    del x1  # m2(x1) is a dead value inside m1.forward; dropped per perf review.
    bits = jax.random.randint(key, (1, 1), 0, 1 << 24, dtype=jnp.int32)
    out = pl.pallas_call(
        _rand_like_kernel,
        out_shape=jax.ShapeDtypeStruct((1, 1), jnp.float32),
        in_specs=[pl.BlockSpec(memory_space=pltpu.MemorySpace.VMEM)],
        out_specs=pl.BlockSpec(memory_space=pltpu.MemorySpace.VMEM),
        cost_estimate=pl.CostEstimate(
            flops=1, transcendentals=0, bytes_accessed=8),
    )(bits)
    return out.reshape((1,))


# ---------------------------------------------------------------------------
# m2: x ** p1 followed by dropout(p=0.5, training).  Dead inside m1; kept as a
# standalone kernel only for inspection / completeness.
# ---------------------------------------------------------------------------
def _m2_dropout_kernel(x_ref, bits_ref, out_ref):
    """x_ref: VMEM (1,N) f32; bits_ref: VMEM (1,N) int32 in [0, 2^24)."""
    # p1 == 1 -> identity (special-cased at trace time; no integer_pow op).
    x2 = x_ref[...] if P1 == 1 else x_ref[...] ** P1
    thresh = jnp.int32(int(DROP_P * (1 << 24)))
    keep = bits_ref[...] >= thresh                 # P(keep) = 1 - DROP_P
    scale = jnp.float32(1.0 / (1.0 - DROP_P))
    out_ref[...] = jnp.where(keep, x2 * scale, jnp.float32(0.0))


def m2_forward(x1, key):
    """m2.forward(x1): dropout(x1 ** p1), shape-preserving."""
    b, h, w = x1.shape
    n = h * w
    x2d = x1.reshape(b, n).astype(jnp.float32)
    bits = jax.random.randint(key, (b, n), 0, 1 << 24, dtype=jnp.int32)
    out = pl.pallas_call(
        _m2_dropout_kernel,
        out_shape=jax.ShapeDtypeStruct((b, n), jnp.float32),
        in_specs=[
            pl.BlockSpec(memory_space=pltpu.MemorySpace.VMEM),
            pl.BlockSpec(memory_space=pltpu.MemorySpace.VMEM),
        ],
        out_specs=pl.BlockSpec(memory_space=pltpu.MemorySpace.VMEM),
        cost_estimate=pl.CostEstimate(
            flops=2 * b * n, transcendentals=0, bytes_accessed=12 * b * n),
    )(x2d, bits)
    return out.reshape(b, h, w)


if __name__ == "__main__":
    key = jax.random.PRNGKey(0)
    k_x, k_m1, k_m2 = jax.random.split(key, 3)

    # x1 = torch.randn(1, 2, 2) equivalent
    x1 = jax.random.normal(k_x, (1, 2, 2), dtype=jnp.float32)

    # m1.forward: the actual module output -- shape (1,), uniform [0,1).
    x4 = m1_forward(x1, k_m1)
    jax.block_until_ready(x4)
    assert x4.shape == (1,) and x4.dtype == jnp.float32
    assert bool(jnp.all((x4 >= 0.0) & (x4 < 1.0)))

    # Optional sanity check of the inner m2 dropout path (dead inside m1).
    m2_out = m2_forward(x1, k_m2)
    jax.block_until_ready(m2_out)
    assert m2_out.shape == (1, 2, 2) and m2_out.dtype == jnp.float32
    # Each element is either 0 (dropped) or 2 * x (kept, scaled by 1/(1-p)).
    ok = jnp.isclose(m2_out, 0.0) | jnp.isclose(m2_out, 2.0 * x1)
    assert bool(jnp.all(ok))

    print("KERNEL_OK")
</pallas_src>

<mosaic_0001>
module attributes {stable_mosaic.version = 11 : i64} {
  func.func @_rand_like_kernel(%arg0: memref<1x1xi32, #tpu.memory_space<vmem>>, %arg1: memref<1x1xf32, #tpu.memory_space<vmem>>) attributes {dimension_semantics = [], scalar_prefetch = 0 : i64, scratch_operands = 0 : i64, tpu.core_type = #tpu.core_type<tc>} {
    %c0 = arith.constant 0 : index
    %c0_0 = arith.constant 0 : index
    %0 = vector.load %arg0[%c0, %c0_0] : memref<1x1xi32, #tpu.memory_space<vmem>>, vector<1x1xi32>
    %1 = arith.sitofp %0 : vector<1x1xi32> to vector<1x1xf32>
    %cst = arith.constant 5.96046448E-8 : f32
    %2 = vector.broadcast %cst : f32 to vector<1x1xf32>
    %3 = arith.mulf %1, %2 : vector<1x1xf32>
    %c0_1 = arith.constant 0 : index
    %c0_2 = arith.constant 0 : index
    %4 = vector.load %arg1[%c0_1, %c0_2] : memref<1x1xf32, #tpu.memory_space<vmem>>, vector<1x1xf32>
    tpu.vector_store %arg1[%c0_1, %c0_2], %3 {strides = array<i32>} : memref<1x1xf32, #tpu.memory_space<vmem>>, vector<1x1xf32>,
    return
  }
}

</mosaic_0001>

<llo_original>
// kernel: tpu_custom_call.1
$region0: #{tpu_custom_call.1}
  #allocation0 [shape = 'u32[]', space=smem, size = 0x4, offset = 0x4, fixed_abs, tag = 'smem constant byte address 0x4 - core index']
  #allocation1 [shape = 'u32[144,128]{1,0:T(1,128)}', space=vmem, size = 0x12000, scoped, tag = 'internal scratch']
  #allocation2 [shape = 's32[1,1]{1,0:T(1,128)S(1)}', space=vmem, size = 0x200, scoped, tag = 'scoped memory for tpu_custom_call.1']
  %s0 = inlined_call_operand.<no memory space> [shape: s32[1,1], index: 0, kind: input, shape index: {}]
  %s1 = inlined_call_operand.hbm [shape: f32[1,1], index: 1, kind: output, shape index: {}]
  %s2 = sld [smem:[#allocation0]]
  $region14: #{tpu_custom_call.1} parent=0
    _
  %s4 = ssub.s32 1, %s2
  %s5 = scalar_select 0, %s4, %s2
  %v6 = vstv %s0
  %7 = vst [vmem:[#allocation2] sm:$0x1] %v6
  $region1: #{tpu_custom_call.1} parent=0
    #allocation3 [shape = 'u8[512]{0}', space=vmem, size = 0x400, scoped, tag = 'output window, operand 0, single buffered']
    #allocation4 [shape = 's32[1]{0}', space=sflag, size = 0x4, scoped, tag = 'scoped memory for tpu_custom_call.1']
    %8 = vsyncpa [#allocation4], 0
    // Predicated region
    $region2: #{tpu_custom_call.1} parent=1 // pred_check
      _
    $region3: #{tpu_custom_call.1} parent=1 // pred_check_branch
      %10 = sbr.rel (0) target = $region5
    $region4: #{tpu_custom_call.1} parent=1 // pred_region
      _
    $region5: #{tpu_custom_call.1} parent=1 // pred_fallthru
      _
    %v11 = vld [vmem:[#allocation2] sm:$0x1]
    %v12 = vcvt.s32.f32 %v11
    %v13 = vmul.f32 %v12, 5.9604645e-08
    %vm14 = vcmask 0
    %15 = vst.msk [vmem:[#allocation3] sm:$0x1] %vm14, %v13
    // Predicated region
    $region6: #{tpu_custom_call.1} parent=1 // pred_check
      _
    $region7: #{tpu_custom_call.1} parent=1 // pred_check_branch
      %17 = sbr.rel (0) target = $region9
    $region8: #{tpu_custom_call.1} parent=1 // pred_region
      %s19 = ssub.s32 16, 16
      %20 = vsyncadd [#allocation4], %s19
      %s22 = sshll.u32 [#allocation3], 4
      %s23 = int_to_ptr.vmem [resolvable:$true] %s22
      %25 = dma.vmem_to_hbm [thread:$0]  %s23, 16, %s1, [#allocation4]
    $region9: #{tpu_custom_call.1} parent=1 // pred_fallthru
      _
    // Predicated region
    $region10: #{tpu_custom_call.1} parent=1 // pred_check
      _
    $region11: #{tpu_custom_call.1} parent=1 // pred_check_branch
      %27 = sbr.rel (0) target = $region13
    $region12: #{tpu_custom_call.1} parent=1 // pred_region
      %28 = dma.done [#allocation4], 16
    $region13: #{tpu_custom_call.1} parent=1 // pred_fallthru
      _
    %29 = vsyncpa [#allocation4], 1

</llo_original>
